<compile_context>
chip_gen: v5e
topology: v5e:2x2
jax: 0.10.0
libtpu: 0.0.40
codegen_flags: <defaults>
</compile_context>

<pallas_src>
import jax
import jax.numpy as jnp
from jax.experimental import pallas as pl
from jax.experimental.pallas import tpu as pltpu

KH, KW = 3, 3          # conv kernel size (padding=1 -> "same" output)


def _make_conv_rows_kernel(n_batch, h_out, hp_rows):
    """Build the kernel closed over static shape parameters.

    Refs seen by the kernel (all VMEM, single grid step):
      x_ref : (N*Hp, Wp*Cin)        zero-padded input rows
      t_ref : (KH, Wp*Cin, W*Cout)  kw-banded (Toeplitz) conv weights
      b_ref : (1, W*Cout)           bias tiled over (w, cout)
      o_ref : (N*H, W*Cout)         output rows (n*H+h, w*Cout+co), lane-dense
    """
    def kernel(x_ref, t_ref, b_ref, o_ref):
        for n in range(n_batch):                    # static unroll (N tiny)
            row0 = n * hp_rows
            acc = None
            for kh in range(KH):                    # static unroll over taps
                a_kh = x_ref[row0 + kh:row0 + kh + h_out, :]   # (H, Wp*Cin)
                d = jnp.dot(a_kh, t_ref[kh],
                            preferred_element_type=jnp.float32)
                acc = d if acc is None else acc + d
            acc = acc + b_ref[...]                  # (1, W*Cout) broadcasts
            o_ref[n * h_out:(n + 1) * h_out, :] = (
                jnp.maximum(acc, 0.0).astype(o_ref.dtype))     # ReLU
    return kernel


@jax.jit
def feature_layer_forward(x_nchw, w, b):
    """Forward pass of FeatureLayer.

    x_nchw : (N, Cin, H, W)       float32 (PyTorch NCHW convention)
    w      : (KH, KW, Cin, Cout)  float32
    b      : (Cout,)              float32
    returns: (N, H, W, Cout)      float32 (NHWC features, no gradient)
    """
    n, cin, h, wd = x_nchw.shape
    cout = w.shape[-1]
    hp, wp = h + 2, wd + 2               # SAME padding for a 3x3 kernel

    # ---- wrapper glue (one small XLA fusion): NCHW -> padded NHWC rows -----
    x_nhwc = jnp.transpose(x_nchw, (0, 2, 3, 1))                 # (N, H, W, Cin)
    x_pad = jnp.pad(x_nhwc, ((0, 0), (1, 1), (1, 1), (0, 0)))    # (N, Hp, Wp, Cin)
    x_rows = x_pad.reshape(n * hp, wp * cin)                     # free reshape

    # ---- kw-banded weight expansion (weight-sized, built once per call) ----
    # T[kh, wp*Cin+ci, w*Cout+co] = w[kh, wp-w, ci, co] if 0 <= wp-w < KW else 0
    sel = (jnp.arange(wp)[None, :, None] ==
           (jnp.arange(wd)[None, None, :] + jnp.arange(KW)[:, None, None])
           ).astype(w.dtype)                                     # (KW, Wp, W)
    t_mat = jnp.einsum('bpq,abcd->apcqd', sel, w)                # (KH, Wp, Cin, W, Cout)
    t_mat = t_mat.reshape(KH, wp * cin, wd * cout)               # (3, 72, 128)
    bias_row = jnp.tile(b, wd).reshape(1, wd * cout)             # (1, 128)

    flops = 2 * KH * (n * h) * (wp * cin) * (wd * cout)
    bytes_accessed = 4 * (n * hp * wp * cin                      # x_rows
                          + KH * wp * cin * wd * cout            # t_mat
                          + wd * cout                            # bias
                          + n * h * wd * cout)                   # output

    out_rows = pl.pallas_call(
        _make_conv_rows_kernel(n, h, hp),
        out_shape=jax.ShapeDtypeStruct((n * h, wd * cout), jnp.float32),
        grid=(1,),   # single step: this size is dispatch/HBM-bound, not compute
        in_specs=[
            pl.BlockSpec((n * hp, wp * cin), lambda i: (0, 0)),
            pl.BlockSpec((KH, wp * cin, wd * cout), lambda i: (0, 0, 0)),
            pl.BlockSpec((1, wd * cout), lambda i: (0, 0)),
        ],
        out_specs=pl.BlockSpec((n * h, wd * cout), lambda i: (0, 0)),
        compiler_params=pltpu.CompilerParams(
            dimension_semantics=("arbitrary",)),
        cost_estimate=pl.CostEstimate(flops=flops, transcendentals=0,
                                      bytes_accessed=bytes_accessed),
    )(x_rows, t_mat, bias_row)

    # (N*H, W*Cout) -> (N, H, W, Cout): row-major compatible, metadata only.
    feats = out_rows.reshape(n, h, wd, cout)

    # torch.no_grad() analogue: features carry no gradient.
    return jax.lax.stop_gradient(feats)


if __name__ == "__main__":
    key = jax.random.PRNGKey(0)
    k_x, k_w, k_b = jax.random.split(key, 3)

    N, CIN, H, W = 2, 4, 16, 16
    COUT = 8

    x = jax.random.normal(k_x, (N, CIN, H, W), dtype=jnp.float32)
    # Deterministic parameter init (Conv2d(4, 8, 3, padding=1)).
    w = jax.random.normal(k_w, (KH, KW, CIN, COUT), dtype=jnp.float32) * 0.1
    b = jax.random.normal(k_b, (COUT,), dtype=jnp.float32) * 0.1

    feats = feature_layer_forward(x, w, b)
    feats = jax.block_until_ready(feats)

    # Reference check with plain-JAX conv (NHWC layout).
    x_nhwc = jnp.transpose(x, (0, 2, 3, 1))
    ref = jax.lax.conv_general_dilated(
        x_nhwc, w, window_strides=(1, 1), padding="SAME",
        dimension_numbers=("NHWC", "HWIO", "NHWC"))
    ref = jnp.maximum(ref + b[None, None, None, :], 0.0)
    assert feats.shape == (N, H, W, COUT)
    assert jnp.allclose(feats, ref, atol=1e-4, rtol=1e-4)

    print("KERNEL_OK")
</pallas_src>

<mosaic_0001>
module attributes {stable_mosaic.version = 11 : i64} {
  func.func @kernel(%arg0: i32, %arg1: memref<36x72xf32, #tpu.memory_space<vmem>>, %arg2: memref<3x72x128xf32, #tpu.memory_space<vmem>>, %arg3: memref<1x128xf32, #tpu.memory_space<vmem>>, %arg4: memref<32x128xf32, #tpu.memory_space<vmem>>) attributes {dimension_semantics = [#tpu.dimension_semantics<arbitrary>], iteration_bounds = array<i64: 1>, scalar_prefetch = 0 : i64, scratch_operands = 0 : i64, tpu.core_type = #tpu.core_type<tc>, window_params = [{pipeline_mode = #tpu.pipeline_mode<synchronous>, transform_indices = @transform_0, window_bounds = array<i64: 36, 72>}, {pipeline_mode = #tpu.pipeline_mode<synchronous>, transform_indices = @transform_1, window_bounds = array<i64: 3, 72, 128>}, {pipeline_mode = #tpu.pipeline_mode<synchronous>, transform_indices = @transform_2, window_bounds = array<i64: 1, 128>}, {pipeline_mode = #tpu.pipeline_mode<synchronous>, transform_indices = @transform_3, window_bounds = array<i64: 32, 128>}]} {
    %c0 = arith.constant 0 : index
    %c0_0 = arith.constant 0 : index
    %0 = vector.load %arg1[%c0, %c0_0] : memref<36x72xf32, #tpu.memory_space<vmem>>, vector<16x72xf32>
    %c0_1 = arith.constant 0 : index
    %c0_2 = arith.constant 0 : index
    %c0_3 = arith.constant 0 : index
    %1 = vector.load %arg2[%c0_1, %c0_2, %c0_3] : memref<3x72x128xf32, #tpu.memory_space<vmem>>, vector<1x72x128xf32>
    %2 = vector.shape_cast %1 : vector<1x72x128xf32> to vector<72x128xf32>
    %cst = arith.constant dense<0.000000e+00> : vector<16x128xf32>
    %3 = tpu.matmul %0, %2, %cst {dimension_numbers = #tpu.dot_dimension_numbers<[1], [0], [0], [1], [0, 0, 1, 1], [], []>} : vector<16x72xf32>, vector<72x128xf32>, vector<16x128xf32> -> vector<16x128xf32>
    %c1 = arith.constant 1 : index
    %c0_4 = arith.constant 0 : index
    %4 = vector.load %arg1[%c1, %c0_4] : memref<36x72xf32, #tpu.memory_space<vmem>>, vector<16x72xf32>
    %c1_5 = arith.constant 1 : index
    %c0_6 = arith.constant 0 : index
    %c0_7 = arith.constant 0 : index
    %5 = vector.load %arg2[%c1_5, %c0_6, %c0_7] : memref<3x72x128xf32, #tpu.memory_space<vmem>>, vector<1x72x128xf32>
    %6 = vector.shape_cast %5 : vector<1x72x128xf32> to vector<72x128xf32>
    %cst_8 = arith.constant dense<0.000000e+00> : vector<16x128xf32>
    %7 = tpu.matmul %4, %6, %cst_8 {dimension_numbers = #tpu.dot_dimension_numbers<[1], [0], [0], [1], [0, 0, 1, 1], [], []>} : vector<16x72xf32>, vector<72x128xf32>, vector<16x128xf32> -> vector<16x128xf32>
    %8 = arith.addf %3, %7 : vector<16x128xf32>
    %c2 = arith.constant 2 : index
    %c0_9 = arith.constant 0 : index
    %9 = vector.load %arg1[%c2, %c0_9] : memref<36x72xf32, #tpu.memory_space<vmem>>, vector<16x72xf32>
    %c2_10 = arith.constant 2 : index
    %c0_11 = arith.constant 0 : index
    %c0_12 = arith.constant 0 : index
    %10 = vector.load %arg2[%c2_10, %c0_11, %c0_12] : memref<3x72x128xf32, #tpu.memory_space<vmem>>, vector<1x72x128xf32>
    %11 = vector.shape_cast %10 : vector<1x72x128xf32> to vector<72x128xf32>
    %cst_13 = arith.constant dense<0.000000e+00> : vector<16x128xf32>
    %12 = tpu.matmul %9, %11, %cst_13 {dimension_numbers = #tpu.dot_dimension_numbers<[1], [0], [0], [1], [0, 0, 1, 1], [], []>} : vector<16x72xf32>, vector<72x128xf32>, vector<16x128xf32> -> vector<16x128xf32>
    %13 = arith.addf %8, %12 : vector<16x128xf32>
    %c0_14 = arith.constant 0 : index
    %c0_15 = arith.constant 0 : index
    %14 = vector.load %arg3[%c0_14, %c0_15] : memref<1x128xf32, #tpu.memory_space<vmem>>, vector<1x128xf32>
    %15 = vector.broadcast %14 : vector<1x128xf32> to vector<16x128xf32>
    %16 = arith.addf %13, %15 : vector<16x128xf32>
    %cst_16 = arith.constant 0.000000e+00 : f32
    %17 = vector.broadcast %cst_16 : f32 to vector<16x128xf32>
    %18 = arith.maximumf %16, %17 : vector<16x128xf32>
    %c0_17 = arith.constant 0 : index
    %c0_18 = arith.constant 0 : index
    %19 = vector.load %arg4[%c0_17, %c0_18] : memref<32x128xf32, #tpu.memory_space<vmem>>, vector<16x128xf32>
    tpu.vector_store %arg4[%c0_17, %c0_18], %18 {strides = array<i32>} : memref<32x128xf32, #tpu.memory_space<vmem>>, vector<16x128xf32>,
    %c18 = arith.constant 18 : index
    %c0_19 = arith.constant 0 : index
    %20 = vector.load %arg1[%c18, %c0_19] : memref<36x72xf32, #tpu.memory_space<vmem>>, vector<16x72xf32>
    %c0_20 = arith.constant 0 : index
    %c0_21 = arith.constant 0 : index
    %c0_22 = arith.constant 0 : index
    %21 = vector.load %arg2[%c0_20, %c0_21, %c0_22] : memref<3x72x128xf32, #tpu.memory_space<vmem>>, vector<1x72x128xf32>
    %22 = vector.shape_cast %21 : vector<1x72x128xf32> to vector<72x128xf32>
    %cst_23 = arith.constant dense<0.000000e+00> : vector<16x128xf32>
    %23 = tpu.matmul %20, %22, %cst_23 {dimension_numbers = #tpu.dot_dimension_numbers<[1], [0], [0], [1], [0, 0, 1, 1], [], []>} : vector<16x72xf32>, vector<72x128xf32>, vector<16x128xf32> -> vector<16x128xf32>
    %c19 = arith.constant 19 : index
    %c0_24 = arith.constant 0 : index
    %24 = vector.load %arg1[%c19, %c0_24] : memref<36x72xf32, #tpu.memory_space<vmem>>, vector<16x72xf32>
    %c1_25 = arith.constant 1 : index
    %c0_26 = arith.constant 0 : index
    %c0_27 = arith.constant 0 : index
    %25 = vector.load %arg2[%c1_25, %c0_26, %c0_27] : memref<3x72x128xf32, #tpu.memory_space<vmem>>, vector<1x72x128xf32>
    %26 = vector.shape_cast %25 : vector<1x72x128xf32> to vector<72x128xf32>
    %cst_28 = arith.constant dense<0.000000e+00> : vector<16x128xf32>
    %27 = tpu.matmul %24, %26, %cst_28 {dimension_numbers = #tpu.dot_dimension_numbers<[1], [0], [0], [1], [0, 0, 1, 1], [], []>} : vector<16x72xf32>, vector<72x128xf32>, vector<16x128xf32> -> vector<16x128xf32>
    %28 = arith.addf %23, %27 : vector<16x128xf32>
    %c20 = arith.constant 20 : index
    %c0_29 = arith.constant 0 : index
    %29 = vector.load %arg1[%c20, %c0_29] : memref<36x72xf32, #tpu.memory_space<vmem>>, vector<16x72xf32>
    %c2_30 = arith.constant 2 : index
    %c0_31 = arith.constant 0 : index
    %c0_32 = arith.constant 0 : index
    %30 = vector.load %arg2[%c2_30, %c0_31, %c0_32] : memref<3x72x128xf32, #tpu.memory_space<vmem>>, vector<1x72x128xf32>
    %31 = vector.shape_cast %30 : vector<1x72x128xf32> to vector<72x128xf32>
    %cst_33 = arith.constant dense<0.000000e+00> : vector<16x128xf32>
    %32 = tpu.matmul %29, %31, %cst_33 {dimension_numbers = #tpu.dot_dimension_numbers<[1], [0], [0], [1], [0, 0, 1, 1], [], []>} : vector<16x72xf32>, vector<72x128xf32>, vector<16x128xf32> -> vector<16x128xf32>
    %33 = arith.addf %28, %32 : vector<16x128xf32>
    %c0_34 = arith.constant 0 : index
    %c0_35 = arith.constant 0 : index
    %34 = vector.load %arg3[%c0_34, %c0_35] : memref<1x128xf32, #tpu.memory_space<vmem>>, vector<1x128xf32>
    %35 = vector.broadcast %34 : vector<1x128xf32> to vector<16x128xf32>
    %36 = arith.addf %33, %35 : vector<16x128xf32>
    %cst_36 = arith.constant 0.000000e+00 : f32
    %37 = vector.broadcast %cst_36 : f32 to vector<16x128xf32>
    %38 = arith.maximumf %36, %37 : vector<16x128xf32>
    %c16 = arith.constant 16 : index
    %c0_37 = arith.constant 0 : index
    %39 = vector.load %arg4[%c16, %c0_37] : memref<32x128xf32, #tpu.memory_space<vmem>>, vector<16x128xf32>
    tpu.vector_store %arg4[%c16, %c0_37], %38 {strides = array<i32>} : memref<32x128xf32, #tpu.memory_space<vmem>>, vector<16x128xf32>,
    return
  }
  func.func @transform_0(%arg0: i32) -> (i32, i32) {
    %c0_i32 = arith.constant 0 : i32
    %c0_i32_0 = arith.constant 0 : i32
    %c0_i32_1 = arith.constant 0 : i32
    return %c0_i32, %c0_i32_0 : i32, i32
  }
  func.func @transform_1(%arg0: i32) -> (i32, i32, i32) {
    %c0_i32 = arith.constant 0 : i32
    %c0_i32_0 = arith.constant 0 : i32
    %c0_i32_1 = arith.constant 0 : i32
    %c0_i32_2 = arith.constant 0 : i32
    return %c0_i32, %c0_i32_0, %c0_i32_1 : i32, i32, i32
  }
  func.func @transform_2(%arg0: i32) -> (i32, i32) {
    %c0_i32 = arith.constant 0 : i32
    %c0_i32_0 = arith.constant 0 : i32
    %c0_i32_1 = arith.constant 0 : i32
    return %c0_i32, %c0_i32_0 : i32, i32
  }
  func.func @transform_3(%arg0: i32) -> (i32, i32) {
    %c0_i32 = arith.constant 0 : i32
    %c0_i32_0 = arith.constant 0 : i32
    %c0_i32_1 = arith.constant 0 : i32
    return %c0_i32, %c0_i32_0 : i32, i32
  }
}

</mosaic_0001>

<llo_original>
// kernel: tile.8
$region0: #{tile.8}
  #allocation0 [shape = 's32[1]{0}', space=sflag, size = 0x4, scoped, tag = 'scoped memory for tile.8']
  %s0 = inlined_call_operand.vmem [shape: f32[8], index: 0, kind: input, shape index: {}]
  %s1 = inlined_call_operand.vmem [shape: f32[16,8], index: 1, kind: output, shape index: {}]
  // Predicated region
  $region2: #{tile.8} parent=0 // pred_check
    _
  $region3: #{tile.8} parent=0 // pred_check_branch
    %3 = sbr.rel (0) target = $region5
  $region4: #{tile.8} parent=0 // pred_region
    _
  $region5: #{tile.8} parent=0 // pred_fallthru
    _
  %v4 = vld [vmem:[%s0] ss:$0 sm:$0xff]
  %5 = vst [vmem:[%s1] sm:$0xff] %v4
  %s6 = scalar_lea.vmem %s1, 8
  %7 = vst [vmem:[%s6] sm:$0xff] %v4

// kernel: tile.9
$region0: #{tile.9}
  %s0 = inlined_call_operand.vmem [shape: f32[16,8], index: 0, kind: input, shape index: {}]
  %s1 = inlined_call_operand.vmem [shape: f32[1,128], index: 1, kind: output, shape index: {}]
  $region1: #{tile.9} parent=0
    #allocation0 [shape = 'u8[4096]{0}', space=vmem, size = 0x1000, scoped, tag = 'scoped mem for output reshape']
    %v2 = vld [vmem:[%s0] sm:$0x1]
    %vm3 = vcmask 64512
    %4 = vst.msk [vmem:[#allocation0] sm:$0x1] %vm3, %v2
    %s5 = scalar_lea.vmem %s0, 15
    %v6 = vld [vmem:[%s5] sm:$0x1]
    %7 = vrot.lane.b32.xlu0 %v6, 120
    %v8 = vpop.permute.xlu0 %7
    %vm9 = vcmask 1048512
    %10 = vst.msk [vmem:[#allocation0] sm:$0x1] %vm9, %v8
    %s11 = scalar_lea.vmem %s0, 14
    %v12 = vld [vmem:[%s11] sm:$0x1]
    %13 = vrot.lane.b32.xlu0 %v12, 112
    %v14 = vpop.permute.xlu0 %13
    %vm15 = vcmask 982912
    %16 = vst.msk [vmem:[#allocation0] sm:$0x1] %vm15, %v14
    %s17 = scalar_lea.vmem %s0, 13
    %v18 = vld [vmem:[%s17] sm:$0x1]
    %19 = vrot.lane.b32.xlu0 %v18, 104
    %v20 = vpop.permute.xlu0 %19
    %vm21 = vcmask 917312
    %22 = vst.msk [vmem:[#allocation0] sm:$0x1] %vm21, %v20
    %s23 = scalar_lea.vmem %s0, 12
    %v24 = vld [vmem:[%s23] sm:$0x1]
    %25 = vrot.lane.b32.xlu0 %v24, 96
    %v26 = vpop.permute.xlu0 %25
    %vm27 = vcmask 851712
    %28 = vst.msk [vmem:[#allocation0] sm:$0x1] %vm27, %v26
    %s29 = scalar_lea.vmem %s0, 11
    %v30 = vld [vmem:[%s29] sm:$0x1]
    %31 = vrot.lane.b32.xlu0 %v30, 88
    %v32 = vpop.permute.xlu0 %31
    %vm33 = vcmask 786112
    %34 = vst.msk [vmem:[#allocation0] sm:$0x1] %vm33, %v32
    %s35 = scalar_lea.vmem %s0, 10
    %v36 = vld [vmem:[%s35] sm:$0x1]
    %37 = vrot.lane.b32.xlu0 %v36, 80
    %v38 = vpop.permute.xlu0 %37
    %vm39 = vcmask 720512
    %40 = vst.msk [vmem:[#allocation0] sm:$0x1] %vm39, %v38
    %s41 = scalar_lea.vmem %s0, 9
    %v42 = vld [vmem:[%s41] sm:$0x1]
    %43 = vrot.lane.b32.xlu0 %v42, 72
    %v44 = vpop.permute.xlu0 %43
    %vm45 = vcmask 654912
    %46 = vst.msk [vmem:[#allocation0] sm:$0x1] %vm45, %v44
    %s47 = scalar_lea.vmem %s0, 8
    %v48 = vld [vmem:[%s47] sm:$0x1]
    %49 = vrot.lane.b32.xlu0 %v48, 64
    %v50 = vpop.permute.xlu0 %49
    %vm51 = vcmask 589312
    %52 = vst.msk [vmem:[#allocation0] sm:$0x1] %vm51, %v50
    %s53 = scalar_lea.vmem %s0, 7
    %v54 = vld [vmem:[%s53] sm:$0x1]
    %55 = vrot.lane.b32.xlu0 %v54, 56
    %v56 = vpop.permute.xlu0 %55
    %vm57 = vcmask 523712
    %58 = vst.msk [vmem:[#allocation0] sm:$0x1] %vm57, %v56
    %s59 = scalar_lea.vmem %s0, 6
    %v60 = vld [vmem:[%s59] sm:$0x1]
    %61 = vrot.lane.b32.xlu0 %v60, 48
    %v62 = vpop.permute.xlu0 %61
    %vm63 = vcmask 458112
    %64 = vst.msk [vmem:[#allocation0] sm:$0x1] %vm63, %v62
    %s65 = scalar_lea.vmem %s0, 5
    %v66 = vld [vmem:[%s65] sm:$0x1]
    %67 = vrot.lane.b32.xlu0 %v66, 40
    %v68 = vpop.permute.xlu0 %67
    %vm69 = vcmask 392512
    %70 = vst.msk [vmem:[#allocation0] sm:$0x1] %vm69, %v68
    %s71 = scalar_lea.vmem %s0, 4
    %v72 = vld [vmem:[%s71] sm:$0x1]
    %73 = vrot.lane.b32.xlu0 %v72, 32
    %v74 = vpop.permute.xlu0 %73
    %vm75 = vcmask 326912
    %76 = vst.msk [vmem:[#allocation0] sm:$0x1] %vm75, %v74
    %s77 = scalar_lea.vmem %s0, 3
    %v78 = vld [vmem:[%s77] sm:$0x1]
    %79 = vrot.lane.b32.xlu0 %v78, 24
    %v80 = vpop.permute.xlu0 %79
    %vm81 = vcmask 261312
    %82 = vst.msk [vmem:[#allocation0] sm:$0x1] %vm81, %v80
    %s83 = scalar_lea.vmem %s0, 2
    %v84 = vld [vmem:[%s83] sm:$0x1]
    %85 = vrot.lane.b32.xlu0 %v84, 16
    %v86 = vpop.permute.xlu0 %85
    %vm87 = vcmask 195712
    %88 = vst.msk [vmem:[#allocation0] sm:$0x1] %vm87, %v86
    %s89 = scalar_lea.vmem %s0, 1
    %v90 = vld [vmem:[%s89] sm:$0x1]
    %91 = vrot.lane.b32.xlu0 %v90, 8
    %v92 = vpop.permute.xlu0 %91
    %vm93 = vcmask 130112
    %94 = vst.msk [vmem:[#allocation0] sm:$0x1] %vm93, %v92
    %s96 = ssub.s32 2, 1
    %v97 = vld [vmem:[#allocation0] sm:%s96]
    %s99 = ssub.s32 2, 1
    %100 = vst [vmem:[%s1] sm:%s99] %v97

// kernel: feature_layer_forward.1
$region0: #{feature_layer_forward.1}
  #allocation0 [shape = 'u32[]', space=smem, size = 0x4, offset = 0x4, fixed_abs, tag = 'smem constant byte address 0x4 - core index']
  #allocation1 [shape = 'u32[72,128]{1,0:T(1,128)}', space=vmem, size = 0x9000, scoped, tag = 'internal scratch']
  %s0 = inlined_call_operand.vmem [shape: f32[36,72], index: 0, kind: input, shape index: {}]
  %s1 = inlined_call_operand.vmem [shape: f32[3,72,128], index: 1, kind: input, shape index: {}]
  %s2 = inlined_call_operand.vmem [shape: f32[1,128], index: 2, kind: input, shape index: {}]
  %s3 = inlined_call_operand.vmem [shape: f32[32,128], index: 3, kind: output, shape index: {}]
  %s4 = sld [smem:[#allocation0]]
  $region22: #{feature_layer_forward.1} parent=0
    _
  %s6 = ssub.s32 1, %s4
  %s7 = scalar_select 0, %s6, %s4
  // Predicated region
  $region2: #{feature_layer_forward.1} parent=0 // pred_check
    _
  $region3: #{feature_layer_forward.1} parent=0 // pred_check_branch
    %9 = sbr.rel (0) target = $region5
  $region4: #{feature_layer_forward.1} parent=0 // pred_region
    _
  $region5: #{feature_layer_forward.1} parent=0 // pred_fallthru
    _
  // Predicated region
  $region6: #{feature_layer_forward.1} parent=0 // pred_check
    _
  $region7: #{feature_layer_forward.1} parent=0 // pred_check_branch
    %11 = sbr.rel (0) target = $region9
  $region8: #{feature_layer_forward.1} parent=0 // pred_region
    _
  $region9: #{feature_layer_forward.1} parent=0 // pred_fallthru
    _
  // Predicated region
  $region10: #{feature_layer_forward.1} parent=0 // pred_check
    _
  $region11: #{feature_layer_forward.1} parent=0 // pred_check_branch
    %13 = sbr.rel (0) target = $region13
  $region12: #{feature_layer_forward.1} parent=0 // pred_region
    _
  $region13: #{feature_layer_forward.1} parent=0 // pred_fallthru
    _
  %v14 = vld [vmem:[%s0] sm:$0xff]
  %v15 = vld [vmem:[%s0 + $0x8] sm:$0xff]
  %v16 = vld [vmem:[%s1] sm:$0xff]
  %v17 = vld [vmem:[%s1 + $0x8] sm:$0xff]
  %v18 = vld [vmem:[%s1 + $0x10] sm:$0xff]
  %v19 = vld [vmem:[%s1 + $0x18] sm:$0xff]
  %v20 = vld [vmem:[%s1 + $0x20] sm:$0xff]
  %v21 = vld [vmem:[%s1 + $0x28] sm:$0xff]
  %v22 = vld [vmem:[%s1 + $0x30] sm:$0xff]
  %v23 = vld [vmem:[%s1 + $0x38] sm:$0xff]
  %v24 = vld [vmem:[%s1 + $0x40] sm:$0xff]
  %v25 = vld [vmem:[%s0 + $0x1] sm:$0xff]
  %v26 = vld [vmem:[%s0 + $0x9] sm:$0xff]
  %s27 = scalar_lea.vmem %s1, 72
  %v28 = vld [vmem:[%s27] sm:$0xff]
  %v29 = vld [vmem:[%s27 + $0x8] sm:$0xff]
  %v30 = vld [vmem:[%s27 + $0x10] sm:$0xff]
  %v31 = vld [vmem:[%s27 + $0x18] sm:$0xff]
  %v32 = vld [vmem:[%s27 + $0x20] sm:$0xff]
  %v33 = vld [vmem:[%s27 + $0x28] sm:$0xff]
  %v34 = vld [vmem:[%s27 + $0x30] sm:$0xff]
  %v35 = vld [vmem:[%s27 + $0x38] sm:$0xff]
  %v36 = vld [vmem:[%s27 + $0x40] sm:$0xff]
  %vm37 = vcmask 588800
  %v39 = vsel %vm37, %v25, 0
  %v42 = vsel %vm37, %v26, 0
  %44 = vmatpush.msra.mxu0 0.0
  %45 = vmatpush.msra.mxu0 0.0
  %46 = vmatpush.msra.mxu0 0.0
  %47 = vmatpush.msra.mxu0 0.0
  %48 = vmatpush.msra.mxu0 0.0
  %49 = vmatpush.msra.mxu0 0.0
  %50 = vmatpush.msra.mxu0 0.0
  %51 = vmatpush.msra.mxu0 %v36
  %52 = vmatpush.msra.mxu0 %v35
  %53 = vmatpush.msra.mxu0 %v34
  %54 = vmatpush.msra.mxu0 %v33
  %55 = vmatpush.msra.mxu0 %v32
  %56 = vmatpush.msra.mxu0 %v31
  %57 = vmatpush.msra.mxu0 %v30
  %58 = vmatpush.msra.mxu0 %v29
  %59 = vmatpush.msra.mxu0 %v28
  %60 = vmatmul.f32.gmra.mxu0 %v39
  %v61 = vpop.f32.mrf.mxu0
  %v62 = vadd.f32 0.0, %v61
  %63 = vmatmul.f32.gmra.mxu0 %v42
  %v64 = vpop.f32.mrf.mxu0
  %v65 = vadd.f32 0.0, %v64
  %66 = vdwg.mxu0
  %v68 = vsel %vm37, %v14, 0
  %v71 = vsel %vm37, %v15, 0
  %73 = vmatpush.msra.mxu0 0.0
  %74 = vmatpush.msra.mxu0 0.0
  %75 = vmatpush.msra.mxu0 0.0
  %76 = vmatpush.msra.mxu0 0.0
  %77 = vmatpush.msra.mxu0 0.0
  %78 = vmatpush.msra.mxu0 0.0
  %79 = vmatpush.msra.mxu0 0.0
  %80 = vmatpush.msra.mxu0 %v24
  %81 = vmatpush.msra.mxu0 %v23
  %82 = vmatpush.msra.mxu0 %v22
  %83 = vmatpush.msra.mxu0 %v21
  %84 = vmatpush.msra.mxu0 %v20
  %85 = vmatpush.msra.mxu0 %v19
  %86 = vmatpush.msra.mxu0 %v18
  %87 = vmatpush.msra.mxu0 %v17
  %88 = vmatpush.msra.mxu0 %v16
  %89 = vmatmul.f32.gmra.mxu0 %v68
  %v90 = vpop.f32.mrf.mxu0
  %v91 = vadd.f32 %v62, %v90
  %92 = vmatmul.f32.gmra.mxu0 %v71
  %v93 = vpop.f32.mrf.mxu0
  %v94 = vadd.f32 %v65, %v93
  %95 = vdwg.mxu0
  %v96 = vld [vmem:[%s0 + $0x2] sm:$0xff]
  %v97 = vld [vmem:[%s0 + $0xa] sm:$0xff]
  %s98 = scalar_lea.vmem %s1, 144
  %v99 = vld [vmem:[%s98] sm:$0xff]
  %v100 = vld [vmem:[%s98 + $0x8] sm:$0xff]
  %v101 = vld [vmem:[%s98 + $0x10] sm:$0xff]
  %v102 = vld [vmem:[%s98 + $0x18] sm:$0xff]
  %v103 = vld [vmem:[%s98 + $0x20] sm:$0xff]
  %v104 = vld [vmem:[%s98 + $0x28] sm:$0xff]
  %v105 = vld [vmem:[%s98 + $0x30] sm:$0xff]
  %v106 = vld [vmem:[%s98 + $0x38] sm:$0xff]
  %v107 = vld [vmem:[%s98 + $0x40] sm:$0xff]
  %v109 = vsel %vm37, %v96, 0
  %v112 = vsel %vm37, %v97, 0
  %114 = vmatpush.msra.mxu0 0.0
  %115 = vmatpush.msra.mxu0 0.0
  %116 = vmatpush.msra.mxu0 0.0
  %117 = vmatpush.msra.mxu0 0.0
  %118 = vmatpush.msra.mxu0 0.0
  %119 = vmatpush.msra.mxu0 0.0
  %120 = vmatpush.msra.mxu0 0.0
  %121 = vmatpush.msra.mxu0 %v107
  %122 = vmatpush.msra.mxu0 %v106
  %123 = vmatpush.msra.mxu0 %v105
  %124 = vmatpush.msra.mxu0 %v104
  %125 = vmatpush.msra.mxu0 %v103
  %126 = vmatpush.msra.mxu0 %v102
  %127 = vmatpush.msra.mxu0 %v101
  %128 = vmatpush.msra.mxu0 %v100
  %129 = vmatpush.msra.mxu0 %v99
  %130 = vmatmul.f32.gmra.mxu0 %v109
  %v131 = vpop.f32.mrf.mxu0
  %v132 = vadd.f32 0.0, %v131
  %133 = vmatmul.f32.gmra.mxu0 %v112
  %v134 = vpop.f32.mrf.mxu0
  %v135 = vadd.f32 0.0, %v134
  %136 = vdwg.mxu0
  %v137 = vadd.f32 %v91, %v132
  %v138 = vadd.f32 %v94, %v135
  %v139 = vld [vmem:[%s2] sm:$0x1]
  %v141 = vperm.slane %v139, 0
  %v143 = vadd.f32 %v137, %v141
  %v144 = vadd.f32 %v138, %v141
  %v145 = vmax.f32 %v143, 0.0
  %v146 = vmax.f32 %v144, 0.0
  %147 = vst [vmem:[%s3] sm:$0xff] %v145
  %148 = vst [vmem:[%s3 + $0x8] sm:$0xff] %v146
  %v149 = vld [vmem:[%s0 + $0x12] sm:$0xff]
  %v150 = vld [vmem:[%s0 + $0x1a] sm:$0xff]
  %v151 = vld [vmem:[%s1] sm:$0xff]
  %v152 = vld [vmem:[%s1 + $0x8] sm:$0xff]
  %v153 = vld [vmem:[%s1 + $0x10] sm:$0xff]
  %v154 = vld [vmem:[%s1 + $0x18] sm:$0xff]
  %v155 = vld [vmem:[%s1 + $0x20] sm:$0xff]
  %v156 = vld [vmem:[%s1 + $0x28] sm:$0xff]
  %v157 = vld [vmem:[%s1 + $0x30] sm:$0xff]
  %v158 = vld [vmem:[%s1 + $0x38] sm:$0xff]
  %v159 = vld [vmem:[%s1 + $0x40] sm:$0xff]
  %v160 = vld [vmem:[%s0 + $0x13] sm:$0xff]
  %v161 = vld [vmem:[%s0 + $0x1b] sm:$0xff]
  %v162 = vld [vmem:[%s27] sm:$0xff]
  %v163 = vld [vmem:[%s27 + $0x8] sm:$0xff]
  %v164 = vld [vmem:[%s27 + $0x10] sm:$0xff]
  %v165 = vld [vmem:[%s27 + $0x18] sm:$0xff]
  %v166 = vld [vmem:[%s27 + $0x20] sm:$0xff]
  %v167 = vld [vmem:[%s27 + $0x28] sm:$0xff]
  %v168 = vld [vmem:[%s27 + $0x30] sm:$0xff]
  %v169 = vld [vmem:[%s27 + $0x38] sm:$0xff]
  %v170 = vld [vmem:[%s27 + $0x40] sm:$0xff]
  %v172 = vsel %vm37, %v160, 0
  %v175 = vsel %vm37, %v161, 0
  %177 = vmatpush.msra.mxu0 0.0
  %178 = vmatpush.msra.mxu0 0.0
  %179 = vmatpush.msra.mxu0 0.0
  %180 = vmatpush.msra.mxu0 0.0
  %181 = vmatpush.msra.mxu0 0.0
  %182 = vmatpush.msra.mxu0 0.0
  %183 = vmatpush.msra.mxu0 0.0
  %184 = vmatpush.msra.mxu0 %v170
  %185 = vmatpush.msra.mxu0 %v169
  %186 = vmatpush.msra.mxu0 %v168
  %187 = vmatpush.msra.mxu0 %v167
  %188 = vmatpush.msra.mxu0 %v166
  %189 = vmatpush.msra.mxu0 %v165
  %190 = vmatpush.msra.mxu0 %v164
  %191 = vmatpush.msra.mxu0 %v163
  %192 = vmatpush.msra.mxu0 %v162
  %193 = vmatmul.f32.gmra.mxu0 %v172
  %v194 = vpop.f32.mrf.mxu0
  %v195 = vadd.f32 0.0, %v194
  %196 = vmatmul.f32.gmra.mxu0 %v175
  %v197 = vpop.f32.mrf.mxu0
  %v198 = vadd.f32 0.0, %v197
  %199 = vdwg.mxu0
  %v201 = vsel %vm37, %v149, 0
  %v204 = vsel %vm37, %v150, 0
  %206 = vmatpush.msra.mxu0 0.0
  %207 = vmatpush.msra.mxu0 0.0
  %208 = vmatpush.msra.mxu0 0.0
  %209 = vmatpush.msra.mxu0 0.0
  %210 = vmatpush.msra.mxu0 0.0
  %211 = vmatpush.msra.mxu0 0.0
  %212 = vmatpush.msra.mxu0 0.0
  %213 = vmatpush.msra.mxu0 %v159
  %214 = vmatpush.msra.mxu0 %v158
  %215 = vmatpush.msra.mxu0 %v157
  %216 = vmatpush.msra.mxu0 %v156
  %217 = vmatpush.msra.mxu0 %v155
  %218 = vmatpush.msra.mxu0 %v154
  %219 = vmatpush.msra.mxu0 %v153
  %220 = vmatpush.msra.mxu0 %v152
  %221 = vmatpush.msra.mxu0 %v151
  %222 = vmatmul.f32.gmra.mxu0 %v201
  %v223 = vpop.f32.mrf.mxu0
  %v224 = vadd.f32 %v195, %v223
  %225 = vmatmul.f32.gmra.mxu0 %v204
  %v226 = vpop.f32.mrf.mxu0
  %v227 = vadd.f32 %v198, %v226
  %228 = vdwg.mxu0
  %v229 = vld [vmem:[%s0 + $0x14] sm:$0xff]
  %v230 = vld [vmem:[%s0 + $0x1c] sm:$0xff]
  %v231 = vld [vmem:[%s98] sm:$0xff]
  %v232 = vld [vmem:[%s98 + $0x8] sm:$0xff]
  %v233 = vld [vmem:[%s98 + $0x10] sm:$0xff]
  %v234 = vld [vmem:[%s98 + $0x18] sm:$0xff]
  %v235 = vld [vmem:[%s98 + $0x20] sm:$0xff]
  %v236 = vld [vmem:[%s98 + $0x28] sm:$0xff]
  %v237 = vld [vmem:[%s98 + $0x30] sm:$0xff]
  %v238 = vld [vmem:[%s98 + $0x38] sm:$0xff]
  %v239 = vld [vmem:[%s98 + $0x40] sm:$0xff]
  %v241 = vsel %vm37, %v229, 0
  %v244 = vsel %vm37, %v230, 0
  %246 = vmatpush.msra.mxu0 0.0
  %247 = vmatpush.msra.mxu0 0.0
  %248 = vmatpush.msra.mxu0 0.0
  %249 = vmatpush.msra.mxu0 0.0
  %250 = vmatpush.msra.mxu0 0.0
  %251 = vmatpush.msra.mxu0 0.0
  %252 = vmatpush.msra.mxu0 0.0
  %253 = vmatpush.msra.mxu0 %v239
  %254 = vmatpush.msra.mxu0 %v238
  %255 = vmatpush.msra.mxu0 %v237
  %256 = vmatpush.msra.mxu0 %v236
  %257 = vmatpush.msra.mxu0 %v235
  %258 = vmatpush.msra.mxu0 %v234
  %259 = vmatpush.msra.mxu0 %v233
  %260 = vmatpush.msra.mxu0 %v232
  %261 = vmatpush.msra.mxu0 %v231
  %262 = vmatmul.f32.gmra.mxu0 %v241
  %v263 = vpop.f32.mrf.mxu0
  %v264 = vadd.f32 0.0, %v263
  %265 = vmatmul.f32.gmra.mxu0 %v244
  %v266 = vpop.f32.mrf.mxu0
  %v267 = vadd.f32 0.0, %v266
  %268 = vdwg.mxu0
  %v269 = vadd.f32 %v224, %v264
  %v270 = vadd.f32 %v227, %v267
  %v271 = vld [vmem:[%s2] sm:$0x1]
  %v273 = vperm.slane %v271, 0
  %v275 = vadd.f32 %v269, %v273
  %v276 = vadd.f32 %v270, %v273
  %v277 = vmax.f32 %v275, 0.0
  %v278 = vmax.f32 %v276, 0.0
  %279 = vst [vmem:[%s3 + $0x10] sm:$0xff] %v277
  %280 = vst [vmem:[%s3 + $0x18] sm:$0xff] %v278
  // Predicated region
  $region14: #{feature_layer_forward.1} parent=0 // pred_check
    _
  $region15: #{feature_layer_forward.1} parent=0 // pred_check_branch
    %282 = sbr.rel (0) target = $region17
  $region16: #{feature_layer_forward.1} parent=0 // pred_region
    _
  $region17: #{feature_layer_forward.1} parent=0 // pred_fallthru
    _
  // Predicated region
  $region18: #{feature_layer_forward.1} parent=0 // pred_check
    _
  $region19: #{feature_layer_forward.1} parent=0 // pred_check_branch
    %284 = sbr.rel (0) target = $region21
  $region20: #{feature_layer_forward.1} parent=0 // pred_region
    _
  $region21: #{feature_layer_forward.1} parent=0 // pred_fallthru
    _

</llo_original>
